<compile_context>
chip_gen: v5e
topology: v5e:2x2
jax: 0.10.0
libtpu: 0.0.40
codegen_flags: <defaults>
</compile_context>

<pallas_src>
import functools

import jax
import jax.numpy as jnp
from jax.experimental import pallas as pl
from jax.experimental.pallas import tpu as pltpu


def _round_up(x, m):
    return ((x + m - 1) // m) * m


def _mlp_kernel(x_ref, w1_ref, b1_ref, w2_ref, b2_ref, w3_ref, b3_ref,
                alpha_ref, out_ref, *, out_f, compute_dtype):
    alpha = alpha_ref[0, 0]

    def prelu(v):
        return jnp.where(v >= 0, v, alpha * v)

    x = x_ref[...]  # already compute_dtype (pre-cast in wrapper)

    # layer 1: (TB, in) @ (in, h1) + (1, h1)   (f32 accumulate on MXU)
    h = jnp.dot(x, w1_ref[...], preferred_element_type=jnp.float32) + b1_ref[...]
    h = prelu(h)
    # dropout (eval mode) == identity

    # layer 2: (TB, h1) @ (h1, h2) + (1, h2)
    h = jnp.dot(h.astype(compute_dtype), w2_ref[...],
                preferred_element_type=jnp.float32) + b2_ref[...]
    h = prelu(h)
    # dropout (eval mode) == identity

    # layer 3: MXU matmul against 128-lane-padded w3, but only the true
    # out_f columns are stored (masked vst) -> no padded HBM writeback.
    y = jnp.dot(h.astype(compute_dtype), w3_ref[...],
                preferred_element_type=jnp.float32)
    out_ref[...] = (y[:, :out_f] + b3_ref[...]).astype(out_ref.dtype)


def mlp_forward(x, w1, b1, w2, b2, w3, b3, alpha, *,
                tile_b=1024, compute_dtype=jnp.float32):
    """Fused MLP forward. Weights are (in, out); returns (batch, out_features)."""
    batch, in_f = x.shape
    h1 = w1.shape[1]
    h2 = w2.shape[1]
    out_f = w3.shape[1]

    # --- pad final-layer columns to 128 lanes for a clean MXU matmul -------
    out_pad = _round_up(max(out_f, 128), 128)
    w3p = jnp.zeros((h2, out_pad), w3.dtype).at[:, :out_f].set(w3)

    # --- optional reduced-precision operand path (v5e/v6e/v7x bf16 MXU) ----
    # Pre-cast once here so weight DMAs are half-width and no per-step casts
    # run inside the kernel; accumulation stays f32 in the kernel.
    if compute_dtype != jnp.float32:
        x = x.astype(compute_dtype)
        w1 = w1.astype(compute_dtype)
        w2 = w2.astype(compute_dtype)
        w3p = w3p.astype(compute_dtype)

    # --- batch tiling -------------------------------------------------------
    # Pad at most 7 rows so the tile height is sublane-aligned, then stream
    # `tb` rows per grid step.  Ragged last blocks are masked by Pallas, so
    # there is no padding to a full tile (and no extra HBM pass over x for
    # batches that are already multiples of 8).
    pad_b = _round_up(batch, 8)
    if pad_b != batch:
        x = jnp.pad(x, ((0, pad_b - batch), (0, 0)))
    tb = min(tile_b, pad_b)
    grid = (pl.cdiv(pad_b, tb),)

    kernel = functools.partial(_mlp_kernel, out_f=out_f,
                               compute_dtype=compute_dtype)

    op_isize = jnp.dtype(compute_dtype).itemsize
    n_weights = in_f * h1 + h1 * h2 + h2 * out_pad
    cost = pl.CostEstimate(
        flops=2 * pad_b * (in_f * h1 + h1 * h2 + h2 * out_pad),
        transcendentals=0,
        bytes_accessed=(pad_b * in_f * op_isize          # x read
                        + n_weights * op_isize           # weights read
                        + (h1 + h2 + out_f) * 4          # biases read
                        + pad_b * out_f * 4),            # output write
    )

    out = pl.pallas_call(
        kernel,
        out_shape=jax.ShapeDtypeStruct((pad_b, out_f), jnp.float32),
        grid=grid,
        in_specs=[
            # streamed per-step (double-buffered by Pallas)
            pl.BlockSpec((tb, in_f), lambda i: (i, 0)),
            # weights / biases: constant block index -> resident in VMEM
            pl.BlockSpec((in_f, h1), lambda i: (0, 0)),
            pl.BlockSpec((1, h1), lambda i: (0, 0)),
            pl.BlockSpec((h1, h2), lambda i: (0, 0)),
            pl.BlockSpec((1, h2), lambda i: (0, 0)),
            pl.BlockSpec((h2, out_pad), lambda i: (0, 0)),
            pl.BlockSpec((1, out_f), lambda i: (0, 0)),
            # PReLU alpha: tiny scalar in SMEM (whole array, untiled)
            pl.BlockSpec(memory_space=pltpu.MemorySpace.SMEM),
        ],
        # Lane-narrow output: last dim == full array dim satisfies (8,128) rule.
        out_specs=pl.BlockSpec((tb, out_f), lambda i: (i, 0)),
        compiler_params=pltpu.CompilerParams(
            dimension_semantics=("parallel",),
        ),
        cost_estimate=cost,
    )(x, w1, b1.reshape(1, -1), w2, b2.reshape(1, -1),
      w3p, b3.reshape(1, -1), alpha.reshape(1, 1))

    return out[:batch]


if __name__ == "__main__":
    inputs_size, hidden1_size, hidden2_size, outputs_size = 4, 32, 32, 1
    batch = 300  # non-multiple of 8: exercises the 8-row pad + single 304-row tile

    key = jax.random.PRNGKey(0)
    keys = jax.random.split(key, 8)

    # Deterministic parameter init (PyTorch-style uniform bounds).
    def linear_init(kw, kb, fan_in, fan_out):
        bound = 1.0 / jnp.sqrt(fan_in)
        w = jax.random.uniform(kw, (fan_in, fan_out), jnp.float32, -bound, bound)
        b = jax.random.uniform(kb, (fan_out,), jnp.float32, -bound, bound)
        return w, b

    w1, b1 = linear_init(keys[0], keys[1], inputs_size, hidden1_size)
    w2, b2 = linear_init(keys[2], keys[3], hidden1_size, hidden2_size)
    w3, b3 = linear_init(keys[4], keys[5], hidden2_size, outputs_size)
    alpha = jnp.float32(0.25)  # nn.PReLU() default single shared parameter

    x = jax.random.normal(keys[6], (batch, inputs_size), jnp.float32)

    out = mlp_forward(x, w1, b1, w2, b2, w3, b3, alpha)
    out = jax.block_until_ready(out)

    # Pure-JAX reference check (eval-mode dropout == identity).
    def prelu(v, a):
        return jnp.where(v >= 0, v, a * v)

    ref = prelu(x @ w1 + b1, alpha)
    ref = prelu(ref @ w2 + b2, alpha)
    ref = ref @ w3 + b3

    assert out.shape == (batch, outputs_size)
    assert jnp.allclose(out, ref, atol=1e-5, rtol=1e-5)

    print("KERNEL_OK")
</pallas_src>

<mosaic_0001>
module attributes {stable_mosaic.version = 11 : i64} {
  func.func @_mlp_kernel(%arg0: i32, %arg1: memref<304x4xf32, #tpu.memory_space<vmem>>, %arg2: memref<4x32xf32, #tpu.memory_space<vmem>>, %arg3: memref<1x32xf32, #tpu.memory_space<vmem>>, %arg4: memref<32x32xf32, #tpu.memory_space<vmem>>, %arg5: memref<1x32xf32, #tpu.memory_space<vmem>>, %arg6: memref<32x128xf32, #tpu.memory_space<vmem>>, %arg7: memref<1x1xf32, #tpu.memory_space<vmem>>, %arg8: memref<1x1xf32, #tpu.memory_space<smem>>, %arg9: memref<304x1xf32, #tpu.memory_space<vmem>>) attributes {dimension_semantics = [#tpu.dimension_semantics<parallel>], iteration_bounds = array<i64: 1>, scalar_prefetch = 0 : i64, scratch_operands = 0 : i64, tpu.core_type = #tpu.core_type<tc>, window_params = [{transform_indices = @transform_0, window_bounds = array<i64: 304, 4>}, {pipeline_mode = #tpu.pipeline_mode<synchronous>, transform_indices = @transform_1, window_bounds = array<i64: 4, 32>}, {pipeline_mode = #tpu.pipeline_mode<synchronous>, transform_indices = @transform_2, window_bounds = array<i64: 1, 32>}, {pipeline_mode = #tpu.pipeline_mode<synchronous>, transform_indices = @transform_3, window_bounds = array<i64: 32, 32>}, {pipeline_mode = #tpu.pipeline_mode<synchronous>, transform_indices = @transform_4, window_bounds = array<i64: 1, 32>}, {pipeline_mode = #tpu.pipeline_mode<synchronous>, transform_indices = @transform_5, window_bounds = array<i64: 32, 128>}, {pipeline_mode = #tpu.pipeline_mode<synchronous>, transform_indices = @transform_6, window_bounds = array<i64: 1, 1>}, {transform_indices = @transform_7, window_bounds = array<i64: 1, 1>}, {transform_indices = @transform_8, window_bounds = array<i64: 304, 1>}]} {
    %c0 = arith.constant 0 : index
    %c0_0 = arith.constant 0 : index
    %0 = memref.load %arg8[%c0, %c0_0] : memref<1x1xf32, #tpu.memory_space<smem>>
    %c0_1 = arith.constant 0 : index
    %c0_2 = arith.constant 0 : index
    %1 = vector.load %arg1[%c0_1, %c0_2] : memref<304x4xf32, #tpu.memory_space<vmem>>, vector<304x4xf32>
    %c0_3 = arith.constant 0 : index
    %c0_4 = arith.constant 0 : index
    %2 = vector.load %arg2[%c0_3, %c0_4] : memref<4x32xf32, #tpu.memory_space<vmem>>, vector<4x32xf32>
    %cst = arith.constant dense<0.000000e+00> : vector<304x32xf32>
    %3 = tpu.matmul %1, %2, %cst {dimension_numbers = #tpu.dot_dimension_numbers<[1], [0], [0], [1], [0, 0, 1, 1], [], []>} : vector<304x4xf32>, vector<4x32xf32>, vector<304x32xf32> -> vector<304x32xf32>
    %c0_5 = arith.constant 0 : index
    %c0_6 = arith.constant 0 : index
    %4 = vector.load %arg3[%c0_5, %c0_6] : memref<1x32xf32, #tpu.memory_space<vmem>>, vector<1x32xf32>
    %5 = vector.broadcast %4 : vector<1x32xf32> to vector<304x32xf32>
    %6 = arith.addf %3, %5 : vector<304x32xf32>
    %cst_7 = arith.constant 0.000000e+00 : f32
    %7 = vector.broadcast %cst_7 : f32 to vector<304x32xf32>
    %8 = arith.cmpf oge, %6, %7 : vector<304x32xf32>
    %9 = vector.broadcast %0 : f32 to vector<304x32xf32>
    %10 = arith.mulf %9, %6 : vector<304x32xf32>
    %11 = arith.select %8, %6, %10 : vector<304x32xi1>, vector<304x32xf32>
    %c0_8 = arith.constant 0 : index
    %c0_9 = arith.constant 0 : index
    %12 = vector.load %arg4[%c0_8, %c0_9] : memref<32x32xf32, #tpu.memory_space<vmem>>, vector<32x32xf32>
    %cst_10 = arith.constant dense<0.000000e+00> : vector<304x32xf32>
    %13 = tpu.matmul %11, %12, %cst_10 {dimension_numbers = #tpu.dot_dimension_numbers<[1], [0], [0], [1], [0, 0, 1, 1], [], []>} : vector<304x32xf32>, vector<32x32xf32>, vector<304x32xf32> -> vector<304x32xf32>
    %c0_11 = arith.constant 0 : index
    %c0_12 = arith.constant 0 : index
    %14 = vector.load %arg5[%c0_11, %c0_12] : memref<1x32xf32, #tpu.memory_space<vmem>>, vector<1x32xf32>
    %15 = vector.broadcast %14 : vector<1x32xf32> to vector<304x32xf32>
    %16 = arith.addf %13, %15 : vector<304x32xf32>
    %cst_13 = arith.constant 0.000000e+00 : f32
    %17 = vector.broadcast %cst_13 : f32 to vector<304x32xf32>
    %18 = arith.cmpf oge, %16, %17 : vector<304x32xf32>
    %19 = vector.broadcast %0 : f32 to vector<304x32xf32>
    %20 = arith.mulf %19, %16 : vector<304x32xf32>
    %21 = arith.select %18, %16, %20 : vector<304x32xi1>, vector<304x32xf32>
    %c0_14 = arith.constant 0 : index
    %c0_15 = arith.constant 0 : index
    %22 = vector.load %arg6[%c0_14, %c0_15] : memref<32x128xf32, #tpu.memory_space<vmem>>, vector<32x128xf32>
    %cst_16 = arith.constant dense<0.000000e+00> : vector<304x128xf32>
    %23 = tpu.matmul %21, %22, %cst_16 {dimension_numbers = #tpu.dot_dimension_numbers<[1], [0], [0], [1], [0, 0, 1, 1], [], []>} : vector<304x32xf32>, vector<32x128xf32>, vector<304x128xf32> -> vector<304x128xf32>
    %24 = vector.extract_strided_slice %23 {offsets = [0, 0], sizes = [304, 1], strides = [1, 1]} : vector<304x128xf32> to vector<304x1xf32>
    %c0_17 = arith.constant 0 : index
    %c0_18 = arith.constant 0 : index
    %25 = vector.load %arg7[%c0_17, %c0_18] : memref<1x1xf32, #tpu.memory_space<vmem>>, vector<1x1xf32>
    %26 = vector.broadcast %25 : vector<1x1xf32> to vector<304x1xf32>
    %27 = arith.addf %24, %26 : vector<304x1xf32>
    %c0_19 = arith.constant 0 : index
    %c0_20 = arith.constant 0 : index
    %28 = vector.load %arg9[%c0_19, %c0_20] : memref<304x1xf32, #tpu.memory_space<vmem>>, vector<304x1xf32>
    tpu.vector_store %arg9[%c0_19, %c0_20], %27 {strides = array<i32>} : memref<304x1xf32, #tpu.memory_space<vmem>>, vector<304x1xf32>,
    return
  }
  func.func @transform_0(%arg0: i32) -> (i32, i32) {
    %c0_i32 = arith.constant 0 : i32
    %c0_i32_0 = arith.constant 0 : i32
    return %arg0, %c0_i32 : i32, i32
  }
  func.func @transform_1(%arg0: i32) -> (i32, i32) {
    %c0_i32 = arith.constant 0 : i32
    %c0_i32_0 = arith.constant 0 : i32
    %c0_i32_1 = arith.constant 0 : i32
    return %c0_i32, %c0_i32_0 : i32, i32
  }
  func.func @transform_2(%arg0: i32) -> (i32, i32) {
    %c0_i32 = arith.constant 0 : i32
    %c0_i32_0 = arith.constant 0 : i32
    %c0_i32_1 = arith.constant 0 : i32
    return %c0_i32, %c0_i32_0 : i32, i32
  }
  func.func @transform_3(%arg0: i32) -> (i32, i32) {
    %c0_i32 = arith.constant 0 : i32
    %c0_i32_0 = arith.constant 0 : i32
    %c0_i32_1 = arith.constant 0 : i32
    return %c0_i32, %c0_i32_0 : i32, i32
  }
  func.func @transform_4(%arg0: i32) -> (i32, i32) {
    %c0_i32 = arith.constant 0 : i32
    %c0_i32_0 = arith.constant 0 : i32
    %c0_i32_1 = arith.constant 0 : i32
    return %c0_i32, %c0_i32_0 : i32, i32
  }
  func.func @transform_5(%arg0: i32) -> (i32, i32) {
    %c0_i32 = arith.constant 0 : i32
    %c0_i32_0 = arith.constant 0 : i32
    %c0_i32_1 = arith.constant 0 : i32
    return %c0_i32, %c0_i32_0 : i32, i32
  }
  func.func @transform_6(%arg0: i32) -> (i32, i32) {
    %c0_i32 = arith.constant 0 : i32
    %c0_i32_0 = arith.constant 0 : i32
    %c0_i32_1 = arith.constant 0 : i32
    return %c0_i32, %c0_i32_0 : i32, i32
  }
  func.func @transform_7(%arg0: i32) -> (i32, i32) {
    %c0_i32 = arith.constant 0 : i32
    %c0_i32_0 = arith.constant 0 : i32
    %c0_i32_1 = arith.constant 0 : i32
    return %c0_i32, %c0_i32_0 : i32, i32
  }
  func.func @transform_8(%arg0: i32) -> (i32, i32) {
    %c0_i32 = arith.constant 0 : i32
    %c0_i32_0 = arith.constant 0 : i32
    return %arg0, %c0_i32 : i32, i32
  }
}

</mosaic_0001>

<llo_original>
// kernel: tpu_custom_call.1
$region0: #{tpu_custom_call.1}
  #allocation0 [shape = 'u32[]', space=smem, size = 0x4, offset = 0x4, fixed_abs, tag = 'smem constant byte address 0x4 - core index']
  #allocation1 [shape = 'u32[72,128]{1,0:T(1,128)}', space=vmem, size = 0x9000, scoped, tag = 'internal scratch']
  #allocation2 [shape = 'f32[1,1]{1,0:T(1,128)S(1)}', space=vmem, size = 0x200, scoped, tag = 'scoped memory for tpu_custom_call.1']
  #allocation3 [shape = 'f32[1,1]{1,0:T(1,128)S(6)}', space=smem, size = 0x200, scoped, tag = 'scoped memory for tpu_custom_call.1']
  %s0 = inlined_call_operand.vmem [shape: f32[304,4], index: 0, kind: input, shape index: {}]
  %s1 = inlined_call_operand.vmem [shape: f32[4,32], index: 1, kind: input, shape index: {}]
  %s2 = inlined_call_operand.vmem [shape: f32[1,32], index: 2, kind: input, shape index: {}]
  %s3 = inlined_call_operand.vmem [shape: f32[32,32], index: 3, kind: input, shape index: {}]
  %s4 = inlined_call_operand.vmem [shape: f32[1,32], index: 4, kind: input, shape index: {}]
  %s5 = inlined_call_operand.vmem [shape: f32[32,128], index: 5, kind: input, shape index: {}]
  %s6 = inlined_call_operand.<no memory space> [shape: f32[1,1], index: 6, kind: input, shape index: {}]
  %s7 = inlined_call_operand.<no memory space> [shape: f32[1,1], index: 7, kind: input, shape index: {}]
  %s8 = inlined_call_operand.vmem [shape: f32[304,1], index: 8, kind: output, shape index: {}]
  %s9 = sld [smem:[#allocation0]]
  $region42: #{tpu_custom_call.1} parent=0
    _
  %s11 = ssub.s32 1, %s9
  %s12 = scalar_select 0, %s11, %s9
  %v13 = vstv %s6
  %14 = vst [vmem:[#allocation2] sm:$0x1] %v13
  %15 = sst [smem:[#allocation3]] %s7
  // Predicated region
  $region2: #{tpu_custom_call.1} parent=0 // pred_check
    _
  $region3: #{tpu_custom_call.1} parent=0 // pred_check_branch
    %17 = sbr.rel (0) target = $region5
  $region4: #{tpu_custom_call.1} parent=0 // pred_region
    _
  $region5: #{tpu_custom_call.1} parent=0 // pred_fallthru
    _
  // Predicated region
  $region6: #{tpu_custom_call.1} parent=0 // pred_check
    _
  $region7: #{tpu_custom_call.1} parent=0 // pred_check_branch
    %19 = sbr.rel (0) target = $region9
  $region8: #{tpu_custom_call.1} parent=0 // pred_region
    _
  $region9: #{tpu_custom_call.1} parent=0 // pred_fallthru
    _
  // Predicated region
  $region10: #{tpu_custom_call.1} parent=0 // pred_check
    _
  $region11: #{tpu_custom_call.1} parent=0 // pred_check_branch
    %21 = sbr.rel (0) target = $region13
  $region12: #{tpu_custom_call.1} parent=0 // pred_region
    _
  $region13: #{tpu_custom_call.1} parent=0 // pred_fallthru
    _
  // Predicated region
  $region14: #{tpu_custom_call.1} parent=0 // pred_check
    _
  $region15: #{tpu_custom_call.1} parent=0 // pred_check_branch
    %23 = sbr.rel (0) target = $region17
  $region16: #{tpu_custom_call.1} parent=0 // pred_region
    _
  $region17: #{tpu_custom_call.1} parent=0 // pred_fallthru
    _
  // Predicated region
  $region18: #{tpu_custom_call.1} parent=0 // pred_check
    _
  $region19: #{tpu_custom_call.1} parent=0 // pred_check_branch
    %25 = sbr.rel (0) target = $region21
  $region20: #{tpu_custom_call.1} parent=0 // pred_region
    _
  $region21: #{tpu_custom_call.1} parent=0 // pred_fallthru
    _
  // Predicated region
  $region22: #{tpu_custom_call.1} parent=0 // pred_check
    _
  $region23: #{tpu_custom_call.1} parent=0 // pred_check_branch
    %27 = sbr.rel (0) target = $region25
  $region24: #{tpu_custom_call.1} parent=0 // pred_region
    _
  $region25: #{tpu_custom_call.1} parent=0 // pred_fallthru
    _
  // Predicated region
  $region26: #{tpu_custom_call.1} parent=0 // pred_check
    _
  $region27: #{tpu_custom_call.1} parent=0 // pred_check_branch
    %29 = sbr.rel (0) target = $region29
  $region28: #{tpu_custom_call.1} parent=0 // pred_region
    _
  $region29: #{tpu_custom_call.1} parent=0 // pred_fallthru
    _
  // Predicated region
  $region30: #{tpu_custom_call.1} parent=0 // pred_check
    _
  $region31: #{tpu_custom_call.1} parent=0 // pred_check_branch
    %31 = sbr.rel (0) target = $region33
  $region32: #{tpu_custom_call.1} parent=0 // pred_region
    _
  $region33: #{tpu_custom_call.1} parent=0 // pred_fallthru
    _
  %s32 = sld [smem:[#allocation3]]
  %v33 = vld [vmem:[%s0] sm:$0xff]
  %v34 = vld [vmem:[%s0 + $0x8] sm:$0xff]
  %v35 = vld [vmem:[%s0 + $0x10] sm:$0xff]
  %v36 = vld [vmem:[%s0 + $0x18] sm:$0xff]
  %v37 = vld [vmem:[%s0 + $0x20] sm:$0xff]
  %v38 = vld [vmem:[%s0 + $0x28] sm:$0xff]
  %v39 = vld [vmem:[%s0 + $0x30] sm:$0xff]
  %v40 = vld [vmem:[%s0 + $0x38] sm:$0xff]
  %v41 = vld [vmem:[%s0 + $0x40] sm:$0xff]
  %v42 = vld [vmem:[%s0 + $0x48] sm:$0xff]
  %v43 = vld [vmem:[%s0 + $0x50] sm:$0xff]
  %v44 = vld [vmem:[%s0 + $0x58] sm:$0xff]
  %v45 = vld [vmem:[%s0 + $0x60] sm:$0xff]
  %v46 = vld [vmem:[%s0 + $0x68] sm:$0xff]
  %v47 = vld [vmem:[%s0 + $0x70] sm:$0xff]
  %v48 = vld [vmem:[%s0 + $0x78] sm:$0xff]
  %v49 = vld [vmem:[%s0 + $0x80] sm:$0xff]
  %v50 = vld [vmem:[%s0 + $0x88] sm:$0xff]
  %v51 = vld [vmem:[%s0 + $0x90] sm:$0xff]
  %v52 = vld [vmem:[%s0 + $0x98] sm:$0xff]
  %v53 = vld [vmem:[%s0 + $0xa0] sm:$0xff]
  %v54 = vld [vmem:[%s0 + $0xa8] sm:$0xff]
  %v55 = vld [vmem:[%s0 + $0xb0] sm:$0xff]
  %v56 = vld [vmem:[%s0 + $0xb8] sm:$0xff]
  %v57 = vld [vmem:[%s0 + $0xc0] sm:$0xff]
  %v58 = vld [vmem:[%s0 + $0xc8] sm:$0xff]
  %v59 = vld [vmem:[%s0 + $0xd0] sm:$0xff]
  %v60 = vld [vmem:[%s0 + $0xd8] sm:$0xff]
  %v61 = vld [vmem:[%s0 + $0xe0] sm:$0xff]
  %v62 = vld [vmem:[%s0 + $0xe8] sm:$0xff]
  %v63 = vld [vmem:[%s0 + $0xf0] sm:$0xff]
  %v64 = vld [vmem:[%s0 + $0xf8] sm:$0xff]
  %v65 = vld [vmem:[%s0 + $0x100] sm:$0xff]
  %v66 = vld [vmem:[%s0 + $0x108] sm:$0xff]
  %v67 = vld [vmem:[%s0 + $0x110] sm:$0xff]
  %v68 = vld [vmem:[%s0 + $0x118] sm:$0xff]
  %v69 = vld [vmem:[%s0 + $0x120] sm:$0xff]
  %v70 = vld [vmem:[%s0 + $0x128] sm:$0xff]
  %v71 = vld [vmem:[%s1] sm:$0xf]
  %v72 = vld [vmem:[%s2] sm:$0x1]
  %v74 = vperm.slane %v72, 0
  %vm76 = vcmask 31744
  %v78 = vsel %vm76, %v33, 0
  %v81 = vsel %vm76, %v34, 0
  %v84 = vsel %vm76, %v35, 0
  %v87 = vsel %vm76, %v36, 0
  %v90 = vsel %vm76, %v37, 0
  %v93 = vsel %vm76, %v38, 0
  %v96 = vsel %vm76, %v39, 0
  %v99 = vsel %vm76, %v40, 0
  %v102 = vsel %vm76, %v41, 0
  %v105 = vsel %vm76, %v42, 0
  %v108 = vsel %vm76, %v43, 0
  %v111 = vsel %vm76, %v44, 0
  %v114 = vsel %vm76, %v45, 0
  %v117 = vsel %vm76, %v46, 0
  %v120 = vsel %vm76, %v47, 0
  %v123 = vsel %vm76, %v48, 0
  %v126 = vsel %vm76, %v49, 0
  %v129 = vsel %vm76, %v50, 0
  %v132 = vsel %vm76, %v51, 0
  %v135 = vsel %vm76, %v52, 0
  %v138 = vsel %vm76, %v53, 0
  %v141 = vsel %vm76, %v54, 0
  %v144 = vsel %vm76, %v55, 0
  %v147 = vsel %vm76, %v56, 0
  %v150 = vsel %vm76, %v57, 0
  %v153 = vsel %vm76, %v58, 0
  %v156 = vsel %vm76, %v59, 0
  %v159 = vsel %vm76, %v60, 0
  %v162 = vsel %vm76, %v61, 0
  %v165 = vsel %vm76, %v62, 0
  %v168 = vsel %vm76, %v63, 0
  %v171 = vsel %vm76, %v64, 0
  %v174 = vsel %vm76, %v65, 0
  %v177 = vsel %vm76, %v66, 0
  %v180 = vsel %vm76, %v67, 0
  %v183 = vsel %vm76, %v68, 0
  %v186 = vsel %vm76, %v69, 0
  %v189 = vsel %vm76, %v70, 0
  %vm191 = vcmask 1043456
  %v193 = vsel %vm191, %v71, 0
  %195 = vmatpush.msra.mxu0 0.0
  %196 = vmatpush.msra.mxu0 0.0
  %197 = vmatpush.msra.mxu0 0.0
  %198 = vmatpush.msra.mxu0 0.0
  %199 = vmatpush.msra.mxu0 0.0
  %200 = vmatpush.msra.mxu0 0.0
  %201 = vmatpush.msra.mxu0 0.0
  %202 = vmatpush.msra.mxu0 0.0
  %203 = vmatpush.msra.mxu0 0.0
  %204 = vmatpush.msra.mxu0 0.0
  %205 = vmatpush.msra.mxu0 0.0
  %206 = vmatpush.msra.mxu0 0.0
  %207 = vmatpush.msra.mxu0 0.0
  %208 = vmatpush.msra.mxu0 0.0
  %209 = vmatpush.msra.mxu0 0.0
  %210 = vmatpush.msra.mxu0 %v193
  %211 = vmatmul.f32.gmra.mxu0 %v78
  %v212 = vpop.f32.mrf.mxu0
  %v213 = vadd.f32 %v74, %v212
  %214 = vmatmul.f32.gmra.mxu0 %v81
  %v215 = vpop.f32.mrf.mxu0
  %v216 = vadd.f32 %v74, %v215
  %217 = vmatmul.f32.gmra.mxu0 %v84
  %v218 = vpop.f32.mrf.mxu0
  %v219 = vadd.f32 %v74, %v218
  %220 = vmatmul.f32.gmra.mxu0 %v87
  %v221 = vpop.f32.mrf.mxu0
  %v222 = vadd.f32 %v74, %v221
  %223 = vmatmul.f32.gmra.mxu0 %v90
  %v224 = vpop.f32.mrf.mxu0
  %v225 = vadd.f32 %v74, %v224
  %226 = vmatmul.f32.gmra.mxu0 %v93
  %v227 = vpop.f32.mrf.mxu0
  %v228 = vadd.f32 %v74, %v227
  %229 = vmatmul.f32.gmra.mxu0 %v96
  %v230 = vpop.f32.mrf.mxu0
  %v231 = vadd.f32 %v74, %v230
  %232 = vmatmul.f32.gmra.mxu0 %v99
  %v233 = vpop.f32.mrf.mxu0
  %v234 = vadd.f32 %v74, %v233
  %235 = vmatmul.f32.gmra.mxu0 %v102
  %v236 = vpop.f32.mrf.mxu0
  %v237 = vadd.f32 %v74, %v236
  %238 = vmatmul.f32.gmra.mxu0 %v105
  %v239 = vpop.f32.mrf.mxu0
  %v240 = vadd.f32 %v74, %v239
  %241 = vmatmul.f32.gmra.mxu0 %v108
  %v242 = vpop.f32.mrf.mxu0
  %v243 = vadd.f32 %v74, %v242
  %244 = vmatmul.f32.gmra.mxu0 %v111
  %v245 = vpop.f32.mrf.mxu0
  %v246 = vadd.f32 %v74, %v245
  %247 = vmatmul.f32.gmra.mxu0 %v114
  %v248 = vpop.f32.mrf.mxu0
  %v249 = vadd.f32 %v74, %v248
  %250 = vmatmul.f32.gmra.mxu0 %v117
  %v251 = vpop.f32.mrf.mxu0
  %v252 = vadd.f32 %v74, %v251
  %253 = vmatmul.f32.gmra.mxu0 %v120
  %v254 = vpop.f32.mrf.mxu0
  %v255 = vadd.f32 %v74, %v254
  %256 = vmatmul.f32.gmra.mxu0 %v123
  %v257 = vpop.f32.mrf.mxu0
  %v258 = vadd.f32 %v74, %v257
  %259 = vmatmul.f32.gmra.mxu0 %v126
  %v260 = vpop.f32.mrf.mxu0
  %v261 = vadd.f32 %v74, %v260
  %262 = vmatmul.f32.gmra.mxu0 %v129
  %v263 = vpop.f32.mrf.mxu0
  %v264 = vadd.f32 %v74, %v263
  %265 = vmatmul.f32.gmra.mxu0 %v132
  %v266 = vpop.f32.mrf.mxu0
  %v267 = vadd.f32 %v74, %v266
  %268 = vmatmul.f32.gmra.mxu0 %v135
  %v269 = vpop.f32.mrf.mxu0
  %v270 = vadd.f32 %v74, %v269
  %271 = vmatmul.f32.gmra.mxu0 %v138
  %v272 = vpop.f32.mrf.mxu0
  %v273 = vadd.f32 %v74, %v272
  %274 = vmatmul.f32.gmra.mxu0 %v141
  %v275 = vpop.f32.mrf.mxu0
  %v276 = vadd.f32 %v74, %v275
  %277 = vmatmul.f32.gmra.mxu0 %v144
  %v278 = vpop.f32.mrf.mxu0
  %v279 = vadd.f32 %v74, %v278
  %280 = vmatmul.f32.gmra.mxu0 %v147
  %v281 = vpop.f32.mrf.mxu0
  %v282 = vadd.f32 %v74, %v281
  %283 = vmatmul.f32.gmra.mxu0 %v150
  %v284 = vpop.f32.mrf.mxu0
  %v285 = vadd.f32 %v74, %v284
  %286 = vmatmul.f32.gmra.mxu0 %v153
  %v287 = vpop.f32.mrf.mxu0
  %v288 = vadd.f32 %v74, %v287
  %289 = vmatmul.f32.gmra.mxu0 %v156
  %v290 = vpop.f32.mrf.mxu0
  %v291 = vadd.f32 %v74, %v290
  %292 = vmatmul.f32.gmra.mxu0 %v159
  %v293 = vpop.f32.mrf.mxu0
  %v294 = vadd.f32 %v74, %v293
  %295 = vmatmul.f32.gmra.mxu0 %v162
  %v296 = vpop.f32.mrf.mxu0
  %v297 = vadd.f32 %v74, %v296
  %298 = vmatmul.f32.gmra.mxu0 %v165
  %v299 = vpop.f32.mrf.mxu0
  %v300 = vadd.f32 %v74, %v299
  %301 = vmatmul.f32.gmra.mxu0 %v168
  %v302 = vpop.f32.mrf.mxu0
  %v303 = vadd.f32 %v74, %v302
  %304 = vmatmul.f32.gmra.mxu0 %v171
  %v305 = vpop.f32.mrf.mxu0
  %v306 = vadd.f32 %v74, %v305
  %307 = vmatmul.f32.gmra.mxu0 %v174
  %v308 = vpop.f32.mrf.mxu0
  %v309 = vadd.f32 %v74, %v308
  %310 = vmatmul.f32.gmra.mxu0 %v177
  %v311 = vpop.f32.mrf.mxu0
  %v312 = vadd.f32 %v74, %v311
  %313 = vmatmul.f32.gmra.mxu0 %v180
  %v314 = vpop.f32.mrf.mxu0
  %v315 = vadd.f32 %v74, %v314
  %316 = vmatmul.f32.gmra.mxu0 %v183
  %v317 = vpop.f32.mrf.mxu0
  %v318 = vadd.f32 %v74, %v317
  %319 = vmatmul.f32.gmra.mxu0 %v186
  %v320 = vpop.f32.mrf.mxu0
  %v321 = vadd.f32 %v74, %v320
  %322 = vmatmul.f32.gmra.mxu0 %v189
  %v323 = vpop.f32.mrf.mxu0
  %v324 = vadd.f32 %v74, %v323
  %325 = vdwg.mxu0
  %vm326 = vcmp.ge.f32.partialorder %v213, 0.0
  %vm327 = vcmp.ge.f32.partialorder %v216, 0.0
  %vm328 = vcmp.ge.f32.partialorder %v219, 0.0
  %vm329 = vcmp.ge.f32.partialorder %v222, 0.0
  %vm330 = vcmp.ge.f32.partialorder %v225, 0.0
  %vm331 = vcmp.ge.f32.partialorder %v228, 0.0
  %vm332 = vcmp.ge.f32.partialorder %v231, 0.0
  %vm333 = vcmp.ge.f32.partialorder %v234, 0.0
  %vm334 = vcmp.ge.f32.partialorder %v237, 0.0
  %vm335 = vcmp.ge.f32.partialorder %v240, 0.0
  %vm336 = vcmp.ge.f32.partialorder %v243, 0.0
  %vm337 = vcmp.ge.f32.partialorder %v246, 0.0
  %vm338 = vcmp.ge.f32.partialorder %v249, 0.0
  %vm339 = vcmp.ge.f32.partialorder %v252, 0.0
  %vm340 = vcmp.ge.f32.partialorder %v255, 0.0
  %vm341 = vcmp.ge.f32.partialorder %v258, 0.0
  %vm342 = vcmp.ge.f32.partialorder %v261, 0.0
  %vm343 = vcmp.ge.f32.partialorder %v264, 0.0
  %vm344 = vcmp.ge.f32.partialorder %v267, 0.0
  %vm345 = vcmp.ge.f32.partialorder %v270, 0.0
  %vm346 = vcmp.ge.f32.partialorder %v273, 0.0
  %vm347 = vcmp.ge.f32.partialorder %v276, 0.0
  %vm348 = vcmp.ge.f32.partialorder %v279, 0.0
  %vm349 = vcmp.ge.f32.partialorder %v282, 0.0
  %vm350 = vcmp.ge.f32.partialorder %v285, 0.0
  %vm351 = vcmp.ge.f32.partialorder %v288, 0.0
  %vm352 = vcmp.ge.f32.partialorder %v291, 0.0
  %vm353 = vcmp.ge.f32.partialorder %v294, 0.0
  %vm354 = vcmp.ge.f32.partialorder %v297, 0.0
  %vm355 = vcmp.ge.f32.partialorder %v300, 0.0
  %vm356 = vcmp.ge.f32.partialorder %v303, 0.0
  %vm357 = vcmp.ge.f32.partialorder %v306, 0.0
  %vm358 = vcmp.ge.f32.partialorder %v309, 0.0
  %vm359 = vcmp.ge.f32.partialorder %v312, 0.0
  %vm360 = vcmp.ge.f32.partialorder %v315, 0.0
  %vm361 = vcmp.ge.f32.partialorder %v318, 0.0
  %vm362 = vcmp.ge.f32.partialorder %v321, 0.0
  %vm363 = vcmp.ge.f32.partialorder %v324, 0.0
  %v364 = vstv %s32
  %v365 = vmul.f32 %v364, %v213
  %v366 = vmul.f32 %v364, %v216
  %v367 = vmul.f32 %v364, %v219
  %v368 = vmul.f32 %v364, %v222
  %v369 = vmul.f32 %v364, %v225
  %v370 = vmul.f32 %v364, %v228
  %v371 = vmul.f32 %v364, %v231
  %v372 = vmul.f32 %v364, %v234
  %v373 = vmul.f32 %v364, %v237
  %v374 = vmul.f32 %v364, %v240
  %v375 = vmul.f32 %v364, %v243
  %v376 = vmul.f32 %v364, %v246
  %v377 = vmul.f32 %v364, %v249
  %v378 = vmul.f32 %v364, %v252
  %v379 = vmul.f32 %v364, %v255
  %v380 = vmul.f32 %v364, %v258
  %v381 = vmul.f32 %v364, %v261
  %v382 = vmul.f32 %v364, %v264
  %v383 = vmul.f32 %v364, %v267
  %v384 = vmul.f32 %v364, %v270
  %v385 = vmul.f32 %v364, %v273
  %v386 = vmul.f32 %v364, %v276
  %v387 = vmul.f32 %v364, %v279
  %v388 = vmul.f32 %v364, %v282
  %v389 = vmul.f32 %v364, %v285
  %v390 = vmul.f32 %v364, %v288
  %v391 = vmul.f32 %v364, %v291
  %v392 = vmul.f32 %v364, %v294
  %v393 = vmul.f32 %v364, %v297
  %v394 = vmul.f32 %v364, %v300
  %v395 = vmul.f32 %v364, %v303
  %v396 = vmul.f32 %v364, %v306
  %v397 = vmul.f32 %v364, %v309
  %v398 = vmul.f32 %v364, %v312
  %v399 = vmul.f32 %v364, %v315
  %v400 = vmul.f32 %v364, %v318
  %v401 = vmul.f32 %v364, %v321
  %v402 = vmul.f32 %v364, %v324
  %v403 = vsel %vm326, %v213, %v365
  %v404 = vsel %vm327, %v216, %v366
  %v405 = vsel %vm328, %v219, %v367
  %v406 = vsel %vm329, %v222, %v368
  %v407 = vsel %vm330, %v225, %v369
  %v408 = vsel %vm331, %v228, %v370
  %v409 = vsel %vm332, %v231, %v371
  %v410 = vsel %vm333, %v234, %v372
  %v411 = vsel %vm334, %v237, %v373
  %v412 = vsel %vm335, %v240, %v374
  %v413 = vsel %vm336, %v243, %v375
  %v414 = vsel %vm337, %v246, %v376
  %v415 = vsel %vm338, %v249, %v377
  %v416 = vsel %vm339, %v252, %v378
  %v417 = vsel %vm340, %v255, %v379
  %v418 = vsel %vm341, %v258, %v380
  %v419 = vsel %vm342, %v261, %v381
  %v420 = vsel %vm343, %v264, %v382
  %v421 = vsel %vm344, %v267, %v383
  %v422 = vsel %vm345, %v270, %v384
  %v423 = vsel %vm346, %v273, %v385
  %v424 = vsel %vm347, %v276, %v386
  %v425 = vsel %vm348, %v279, %v387
  %v426 = vsel %vm349, %v282, %v388
  %v427 = vsel %vm350, %v285, %v389
  %v428 = vsel %vm351, %v288, %v390
  %v429 = vsel %vm352, %v291, %v391
  %v430 = vsel %vm353, %v294, %v392
  %v431 = vsel %vm354, %v297, %v393
  %v432 = vsel %vm355, %v300, %v394
  %v433 = vsel %vm356, %v303, %v395
  %v434 = vsel %vm357, %v306, %v396
  %v435 = vsel %vm358, %v309, %v397
  %v436 = vsel %vm359, %v312, %v398
  %v437 = vsel %vm360, %v315, %v399
  %v438 = vsel %vm361, %v318, %v400
  %v439 = vsel %vm362, %v321, %v401
  %v440 = vsel %vm363, %v324, %v402
  %v441 = vld [vmem:[%s3] sm:$0xff]
  %v442 = vld [vmem:[%s3 + $0x8] sm:$0xff]
  %v443 = vld [vmem:[%s3 + $0x10] sm:$0xff]
  %v444 = vld [vmem:[%s3 + $0x18] sm:$0xff]
  %v445 = vld [vmem:[%s4] sm:$0x1]
  %v447 = vperm.slane %v445, 0
  %vm449 = vcmask 261120
  %v451 = vsel %vm449, %v403, 0
  %v454 = vsel %vm449, %v404, 0
  %v457 = vsel %vm449, %v405, 0
  %v460 = vsel %vm449, %v406, 0
  %v463 = vsel %vm449, %v407, 0
  %v466 = vsel %vm449, %v408, 0
  %v469 = vsel %vm449, %v409, 0
  %v472 = vsel %vm449, %v410, 0
  %v475 = vsel %vm449, %v411, 0
  %v478 = vsel %vm449, %v412, 0
  %v481 = vsel %vm449, %v413, 0
  %v484 = vsel %vm449, %v414, 0
  %v487 = vsel %vm449, %v415, 0
  %v490 = vsel %vm449, %v416, 0
  %v493 = vsel %vm449, %v417, 0
  %v496 = vsel %vm449, %v418, 0
  %v499 = vsel %vm449, %v419, 0
  %v502 = vsel %vm449, %v420, 0
  %v505 = vsel %vm449, %v421, 0
  %v508 = vsel %vm449, %v422, 0
  %v511 = vsel %vm449, %v423, 0
  %v514 = vsel %vm449, %v424, 0
  %v517 = vsel %vm449, %v425, 0
  %v520 = vsel %vm449, %v426, 0
  %v523 = vsel %vm449, %v427, 0
  %v526 = vsel %vm449, %v428, 0
  %v529 = vsel %vm449, %v429, 0
  %v532 = vsel %vm449, %v430, 0
  %v535 = vsel %vm449, %v431, 0
  %v538 = vsel %vm449, %v432, 0
  %v541 = vsel %vm449, %v433, 0
  %v544 = vsel %vm449, %v434, 0
  %v547 = vsel %vm449, %v435, 0
  %v550 = vsel %vm449, %v436, 0
  %v553 = vsel %vm449, %v437, 0
  %v556 = vsel %vm449, %v438, 0
  %v559 = vsel %vm449, %v439, 0
  %v562 = vsel %vm449, %v440, 0
  %564 = vmatpush.msra.mxu0 0.0
  %565 = vmatpush.msra.mxu0 0.0
  %566 = vmatpush.msra.mxu0 0.0
  %567 = vmatpush.msra.mxu0 0.0
  %568 = vmatpush.msra.mxu0 0.0
  %569 = vmatpush.msra.mxu0 0.0
  %570 = vmatpush.msra.mxu0 0.0
  %571 = vmatpush.msra.mxu0 0.0
  %572 = vmatpush.msra.mxu0 0.0
  %573 = vmatpush.msra.mxu0 0.0
  %574 = vmatpush.msra.mxu0 0.0
  %575 = vmatpush.msra.mxu0 0.0
  %576 = vmatpush.msra.mxu0 %v444
  %577 = vmatpush.msra.mxu0 %v443
  %578 = vmatpush.msra.mxu0 %v442
  %579 = vmatpush.msra.mxu0 %v441
  %580 = vmatmul.f32.gmra.mxu0 %v451
  %v581 = vpop.f32.mrf.mxu0
  %v582 = vadd.f32 %v447, %v581
  %583 = vmatmul.f32.gmra.mxu0 %v454
  %v584 = vpop.f32.mrf.mxu0
  %v585 = vadd.f32 %v447, %v584
  %586 = vmatmul.f32.gmra.mxu0 %v457
  %v587 = vpop.f32.mrf.mxu0
  %v588 = vadd.f32 %v447, %v587
  %589 = vmatmul.f32.gmra.mxu0 %v460
  %v590 = vpop.f32.mrf.mxu0
  %v591 = vadd.f32 %v447, %v590
  %592 = vmatmul.f32.gmra.mxu0 %v463
  %v593 = vpop.f32.mrf.mxu0
  %v594 = vadd.f32 %v447, %v593
  %595 = vmatmul.f32.gmra.mxu0 %v466
  %v596 = vpop.f32.mrf.mxu0
  %v597 = vadd.f32 %v447, %v596
  %598 = vmatmul.f32.gmra.mxu0 %v469
  %v599 = vpop.f32.mrf.mxu0
  %v600 = vadd.f32 %v447, %v599
  %601 = vmatmul.f32.gmra.mxu0 %v472
  %v602 = vpop.f32.mrf.mxu0
  %v603 = vadd.f32 %v447, %v602
  %604 = vmatmul.f32.gmra.mxu0 %v475
  %v605 = vpop.f32.mrf.mxu0
  %v606 = vadd.f32 %v447, %v605
  %607 = vmatmul.f32.gmra.mxu0 %v478
  %v608 = vpop.f32.mrf.mxu0
  %v609 = vadd.f32 %v447, %v608
  %610 = vmatmul.f32.gmra.mxu0 %v481
  %v611 = vpop.f32.mrf.mxu0
  %v612 = vadd.f32 %v447, %v611
  %613 = vmatmul.f32.gmra.mxu0 %v484
  %v614 = vpop.f32.mrf.mxu0
  %v615 = vadd.f32 %v447, %v614
  %616 = vmatmul.f32.gmra.mxu0 %v487
  %v617 = vpop.f32.mrf.mxu0
  %v618 = vadd.f32 %v447, %v617
  %619 = vmatmul.f32.gmra.mxu0 %v490
  %v620 = vpop.f32.mrf.mxu0
  %v621 = vadd.f32 %v447, %v620
  %622 = vmatmul.f32.gmra.mxu0 %v493
  %v623 = vpop.f32.mrf.mxu0
  %v624 = vadd.f32 %v447, %v623
  %625 = vmatmul.f32.gmra.mxu0 %v496
  %v626 = vpop.f32.mrf.mxu0
  %v627 = vadd.f32 %v447, %v626
  %628 = vmatmul.f32.gmra.mxu0 %v499
  %v629 = vpop.f32.mrf.mxu0
  %v630 = vadd.f32 %v447, %v629
  %631 = vmatmul.f32.gmra.mxu0 %v502
  %v632 = vpop.f32.mrf.mxu0
  %v633 = vadd.f32 %v447, %v632
  %634 = vmatmul.f32.gmra.mxu0 %v505
  %v635 = vpop.f32.mrf.mxu0
  %v636 = vadd.f32 %v447, %v635
  %637 = vmatmul.f32.gmra.mxu0 %v508
  %v638 = vpop.f32.mrf.mxu0
  %v639 = vadd.f32 %v447, %v638
  %640 = vmatmul.f32.gmra.mxu0 %v511
  %v641 = vpop.f32.mrf.mxu0
  %v642 = vadd.f32 %v447, %v641
  %643 = vmatmul.f32.gmra.mxu0 %v514
  %v644 = vpop.f32.mrf.mxu0
  %v645 = vadd.f32 %v447, %v644
  %646 = vmatmul.f32.gmra.mxu0 %v517
  %v647 = vpop.f32.mrf.mxu0
  %v648 = vadd.f32 %v447, %v647
  %649 = vmatmul.f32.gmra.mxu0 %v520
  %v650 = vpop.f32.mrf.mxu0
  %v651 = vadd.f32 %v447, %v650
  %652 = vmatmul.f32.gmra.mxu0 %v523
  %v653 = vpop.f32.mrf.mxu0
  %v654 = vadd.f32 %v447, %v653
  %655 = vmatmul.f32.gmra.mxu0 %v526
  %v656 = vpop.f32.mrf.mxu0
  %v657 = vadd.f32 %v447, %v656
  %658 = vmatmul.f32.gmra.mxu0 %v529
  %v659 = vpop.f32.mrf.mxu0
  %v660 = vadd.f32 %v447, %v659
  %661 = vmatmul.f32.gmra.mxu0 %v532
  %v662 = vpop.f32.mrf.mxu0
  %v663 = vadd.f32 %v447, %v662
  %664 = vmatmul.f32.gmra.mxu0 %v535
  %v665 = vpop.f32.mrf.mxu0
  %v666 = vadd.f32 %v447, %v665
  %667 = vmatmul.f32.gmra.mxu0 %v538
  %v668 = vpop.f32.mrf.mxu0
  %v669 = vadd.f32 %v447, %v668
  %670 = vmatmul.f32.gmra.mxu0 %v541
  %v671 = vpop.f32.mrf.mxu0
  %v672 = vadd.f32 %v447, %v671
  %673 = vmatmul.f32.gmra.mxu0 %v544
  %v674 = vpop.f32.mrf.mxu0
  %v675 = vadd.f32 %v447, %v674
  %676 = vmatmul.f32.gmra.mxu0 %v547
  %v677 = vpop.f32.mrf.mxu0
  %v678 = vadd.f32 %v447, %v677
  %679 = vmatmul.f32.gmra.mxu0 %v550
  %v680 = vpop.f32.mrf.mxu0
  %v681 = vadd.f32 %v447, %v680
  %682 = vmatmul.f32.gmra.mxu0 %v553
  %v683 = vpop.f32.mrf.mxu0
  %v684 = vadd.f32 %v447, %v683
  %685 = vmatmul.f32.gmra.mxu0 %v556
  %v686 = vpop.f32.mrf.mxu0
  %v687 = vadd.f32 %v447, %v686
  %688 = vmatmul.f32.gmra.mxu0 %v559
  %v689 = vpop.f32.mrf.mxu0
  %v690 = vadd.f32 %v447, %v689
  %691 = vmatmul.f32.gmra.mxu0 %v562
  %v692 = vpop.f32.mrf.mxu0
  %v693 = vadd.f32 %v447, %v692
  %694 = vdwg.mxu0
  %vm695 = vcmp.ge.f32.partialorder %v582, 0.0
  %vm696 = vcmp.ge.f32.partialorder %v585, 0.0
  %vm697 = vcmp.ge.f32.partialorder %v588, 0.0
  %vm698 = vcmp.ge.f32.partialorder %v591, 0.0
  %vm699 = vcmp.ge.f32.partialorder %v594, 0.0
  %vm700 = vcmp.ge.f32.partialorder %v597, 0.0
  %vm701 = vcmp.ge.f32.partialorder %v600, 0.0
  %vm702 = vcmp.ge.f32.partialorder %v603, 0.0
  %vm703 = vcmp.ge.f32.partialorder %v606, 0.0
  %vm704 = vcmp.ge.f32.partialorder %v609, 0.0
  %vm705 = vcmp.ge.f32.partialorder %v612, 0.0
  %vm706 = vcmp.ge.f32.partialorder %v615, 0.0
  %vm707 = vcmp.ge.f32.partialorder %v618, 0.0
  %vm708 = vcmp.ge.f32.partialorder %v621, 0.0
  %vm709 = vcmp.ge.f32.partialorder %v624, 0.0
  %vm710 = vcmp.ge.f32.partialorder %v627, 0.0
  %vm711 = vcmp.ge.f32.partialorder %v630, 0.0
  %vm712 = vcmp.ge.f32.partialorder %v633, 0.0
  %vm713 = vcmp.ge.f32.partialorder %v636, 0.0
  %vm714 = vcmp.ge.f32.partialorder %v639, 0.0
  %vm715 = vcmp.ge.f32.partialorder %v642, 0.0
  %vm716 = vcmp.ge.f32.partialorder %v645, 0.0
  %vm717 = vcmp.ge.f32.partialorder %v648, 0.0
  %vm718 = vcmp.ge.f32.partialorder %v651, 0.0
  %vm719 = vcmp.ge.f32.partialorder %v654, 0.0
  %vm720 = vcmp.ge.f32.partialorder %v657, 0.0
  %vm721 = vcmp.ge.f32.partialorder %v660, 0.0
  %vm722 = vcmp.ge.f32.partialorder %v663, 0.0
  %vm723 = vcmp.ge.f32.partialorder %v666, 0.0
  %vm724 = vcmp.ge.f32.partialorder %v669, 0.0
  %vm725 = vcmp.ge.f32.partialorder %v672, 0.0
  %vm726 = vcmp.ge.f32.partialorder %v675, 0.0
  %vm727 = vcmp.ge.f32.partialorder %v678, 0.0
  %vm728 = vcmp.ge.f32.partialorder %v681, 0.0
  %vm729 = vcmp.ge.f32.partialorder %v684, 0.0
  %vm730 = vcmp.ge.f32.partialorder %v687, 0.0
  %vm731 = vcmp.ge.f32.partialorder %v690, 0.0
  %vm732 = vcmp.ge.f32.partialorder %v693, 0.0
  %v733 = vmul.f32 %v364, %v582
  %v734 = vmul.f32 %v364, %v585
  %v735 = vmul.f32 %v364, %v588
  %v736 = vmul.f32 %v364, %v591
  %v737 = vmul.f32 %v364, %v594
  %v738 = vmul.f32 %v364, %v597
  %v739 = vmul.f32 %v364, %v600
  %v740 = vmul.f32 %v364, %v603
  %v741 = vmul.f32 %v364, %v606
  %v742 = vmul.f32 %v364, %v609
  %v743 = vmul.f32 %v364, %v612
  %v744 = vmul.f32 %v364, %v615
  %v745 = vmul.f32 %v364, %v618
  %v746 = vmul.f32 %v364, %v621
  %v747 = vmul.f32 %v364, %v624
  %v748 = vmul.f32 %v364, %v627
  %v749 = vmul.f32 %v364, %v630
  %v750 = vmul.f32 %v364, %v633
  %v751 = vmul.f32 %v364, %v636
  %v752 = vmul.f32 %v364, %v639
  %v753 = vmul.f32 %v364, %v642
  %v754 = vmul.f32 %v364, %v645
  %v755 = vmul.f32 %v364, %v648
  %v756 = vmul.f32 %v364, %v651
  %v757 = vmul.f32 %v364, %v654
  %v758 = vmul.f32 %v364, %v657
  %v759 = vmul.f32 %v364, %v660
  %v760 = vmul.f32 %v364, %v663
  %v761 = vmul.f32 %v364, %v666
  %v762 = vmul.f32 %v364, %v669
  %v763 = vmul.f32 %v364, %v672
  %v764 = vmul.f32 %v364, %v675
  %v765 = vmul.f32 %v364, %v678
  %v766 = vmul.f32 %v364, %v681
  %v767 = vmul.f32 %v364, %v684
  %v768 = vmul.f32 %v364, %v687
  %v769 = vmul.f32 %v364, %v690
  %v770 = vmul.f32 %v364, %v693
  %v771 = vsel %vm695, %v582, %v733
  %v772 = vsel %vm696, %v585, %v734
  %v773 = vsel %vm697, %v588, %v735
  %v774 = vsel %vm698, %v591, %v736
  %v775 = vsel %vm699, %v594, %v737
  %v776 = vsel %vm700, %v597, %v738
  %v777 = vsel %vm701, %v600, %v739
  %v778 = vsel %vm702, %v603, %v740
  %v779 = vsel %vm703, %v606, %v741
  %v780 = vsel %vm704, %v609, %v742
  %v781 = vsel %vm705, %v612, %v743
  %v782 = vsel %vm706, %v615, %v744
  %v783 = vsel %vm707, %v618, %v745
  %v784 = vsel %vm708, %v621, %v746
  %v785 = vsel %vm709, %v624, %v747
  %v786 = vsel %vm710, %v627, %v748
  %v787 = vsel %vm711, %v630, %v749
  %v788 = vsel %vm712, %v633, %v750
  %v789 = vsel %vm713, %v636, %v751
  %v790 = vsel %vm714, %v639, %v752
  %v791 = vsel %vm715, %v642, %v753
  %v792 = vsel %vm716, %v645, %v754
  %v793 = vsel %vm717, %v648, %v755
  %v794 = vsel %vm718, %v651, %v756
  %v795 = vsel %vm719, %v654, %v757
  %v796 = vsel %vm720, %v657, %v758
  %v797 = vsel %vm721, %v660, %v759
  %v798 = vsel %vm722, %v663, %v760
  %v799 = vsel %vm723, %v666, %v761
  %v800 = vsel %vm724, %v669, %v762
  %v801 = vsel %vm725, %v672, %v763
  %v802 = vsel %vm726, %v675, %v764
  %v803 = vsel %vm727, %v678, %v765
  %v804 = vsel %vm728, %v681, %v766
  %v805 = vsel %vm729, %v684, %v767
  %v806 = vsel %vm730, %v687, %v768
  %v807 = vsel %vm731, %v690, %v769
  %v808 = vsel %vm732, %v693, %v770
  %v809 = vld [vmem:[%s5] sm:$0xff]
  %v810 = vld [vmem:[%s5 + $0x8] sm:$0xff]
  %v811 = vld [vmem:[%s5 + $0x10] sm:$0xff]
  %v812 = vld [vmem:[%s5 + $0x18] sm:$0xff]
  %v814 = vsel %vm449, %v771, 0
  %v817 = vsel %vm449, %v772, 0
  %v820 = vsel %vm449, %v773, 0
  %v823 = vsel %vm449, %v774, 0
  %v826 = vsel %vm449, %v775, 0
  %v829 = vsel %vm449, %v776, 0
  %v832 = vsel %vm449, %v777, 0
  %v835 = vsel %vm449, %v778, 0
  %v838 = vsel %vm449, %v779, 0
  %v841 = vsel %vm449, %v780, 0
  %v844 = vsel %vm449, %v781, 0
  %v847 = vsel %vm449, %v782, 0
  %v850 = vsel %vm449, %v783, 0
  %v853 = vsel %vm449, %v784, 0
  %v856 = vsel %vm449, %v785, 0
  %v859 = vsel %vm449, %v786, 0
  %v862 = vsel %vm449, %v787, 0
  %v865 = vsel %vm449, %v788, 0
  %v868 = vsel %vm449, %v789, 0
  %v871 = vsel %vm449, %v790, 0
  %v874 = vsel %vm449, %v791, 0
  %v877 = vsel %vm449, %v792, 0
  %v880 = vsel %vm449, %v793, 0
  %v883 = vsel %vm449, %v794, 0
  %v886 = vsel %vm449, %v795, 0
  %v889 = vsel %vm449, %v796, 0
  %v892 = vsel %vm449, %v797, 0
  %v895 = vsel %vm449, %v798, 0
  %v898 = vsel %vm449, %v799, 0
  %v901 = vsel %vm449, %v800, 0
  %v904 = vsel %vm449, %v801, 0
  %v907 = vsel %vm449, %v802, 0
  %v910 = vsel %vm449, %v803, 0
  %v913 = vsel %vm449, %v804, 0
  %v916 = vsel %vm449, %v805, 0
  %v919 = vsel %vm449, %v806, 0
  %v922 = vsel %vm449, %v807, 0
  %v925 = vsel %vm449, %v808, 0
  %927 = vmatpush.msra.mxu0 0.0
  %928 = vmatpush.msra.mxu0 0.0
  %929 = vmatpush.msra.mxu0 0.0
  %930 = vmatpush.msra.mxu0 0.0
  %931 = vmatpush.msra.mxu0 0.0
  %932 = vmatpush.msra.mxu0 0.0
  %933 = vmatpush.msra.mxu0 0.0
  %934 = vmatpush.msra.mxu0 0.0
  %935 = vmatpush.msra.mxu0 0.0
  %936 = vmatpush.msra.mxu0 0.0
  %937 = vmatpush.msra.mxu0 0.0
  %938 = vmatpush.msra.mxu0 0.0
  %939 = vmatpush.msra.mxu0 %v812
  %940 = vmatpush.msra.mxu0 %v811
  %941 = vmatpush.msra.mxu0 %v810
  %942 = vmatpush.msra.mxu0 %v809
  %943 = vmatmul.f32.gmra.mxu0 %v814
  %v944 = vpop.f32.mrf.mxu0
  %v945 = vadd.f32 0.0, %v944
  %946 = vmatmul.f32.gmra.mxu0 %v817
  %v947 = vpop.f32.mrf.mxu0
  %v948 = vadd.f32 0.0, %v947
  %949 = vmatmul.f32.gmra.mxu0 %v820
  %v950 = vpop.f32.mrf.mxu0
  %v951 = vadd.f32 0.0, %v950
  %952 = vmatmul.f32.gmra.mxu0 %v823
  %v953 = vpop.f32.mrf.mxu0
  %v954 = vadd.f32 0.0, %v953
  %955 = vmatmul.f32.gmra.mxu0 %v826
  %v956 = vpop.f32.mrf.mxu0
  %v957 = vadd.f32 0.0, %v956
  %958 = vmatmul.f32.gmra.mxu0 %v829
  %v959 = vpop.f32.mrf.mxu0
  %v960 = vadd.f32 0.0, %v959
  %961 = vmatmul.f32.gmra.mxu0 %v832
  %v962 = vpop.f32.mrf.mxu0
  %v963 = vadd.f32 0.0, %v962
  %964 = vmatmul.f32.gmra.mxu0 %v835
  %v965 = vpop.f32.mrf.mxu0
  %v966 = vadd.f32 0.0, %v965
  %967 = vmatmul.f32.gmra.mxu0 %v838
  %v968 = vpop.f32.mrf.mxu0
  %v969 = vadd.f32 0.0, %v968
  %970 = vmatmul.f32.gmra.mxu0 %v841
  %v971 = vpop.f32.mrf.mxu0
  %v972 = vadd.f32 0.0, %v971
  %973 = vmatmul.f32.gmra.mxu0 %v844
  %v974 = vpop.f32.mrf.mxu0
  %v975 = vadd.f32 0.0, %v974
  %976 = vmatmul.f32.gmra.mxu0 %v847
  %v977 = vpop.f32.mrf.mxu0
  %v978 = vadd.f32 0.0, %v977
  %979 = vmatmul.f32.gmra.mxu0 %v850
  %v980 = vpop.f32.mrf.mxu0
  %v981 = vadd.f32 0.0, %v980
  %982 = vmatmul.f32.gmra.mxu0 %v853
  %v983 = vpop.f32.mrf.mxu0
  %v984 = vadd.f32 0.0, %v983
  %985 = vmatmul.f32.gmra.mxu0 %v856
  %v986 = vpop.f32.mrf.mxu0
  %v987 = vadd.f32 0.0, %v986
  %988 = vmatmul.f32.gmra.mxu0 %v859
  %v989 = vpop.f32.mrf.mxu0
  %v990 = vadd.f32 0.0, %v989
  %991 = vmatmul.f32.gmra.mxu0 %v862
  %v992 = vpop.f32.mrf.mxu0
  %v993 = vadd.f32 0.0, %v992
  %994 = vmatmul.f32.gmra.mxu0 %v865
  %v995 = vpop.f32.mrf.mxu0
  %v996 = vadd.f32 0.0, %v995
  %997 = vmatmul.f32.gmra.mxu0 %v868
  %v998 = vpop.f32.mrf.mxu0
  %v999 = vadd.f32 0.0, %v998
  %1000 = vmatmul.f32.gmra.mxu0 %v871
  %v1001 = vpop.f32.mrf.mxu0
  %v1002 = vadd.f32 0.0, %v1001
  %1003 = vmatmul.f32.gmra.mxu0 %v874
  %v1004 = vpop.f32.mrf.mxu0
  %v1005 = vadd.f32 0.0, %v1004
  %1006 = vmatmul.f32.gmra.mxu0 %v877
  %v1007 = vpop.f32.mrf.mxu0
  %v1008 = vadd.f32 0.0, %v1007
  %1009 = vmatmul.f32.gmra.mxu0 %v880
  %v1010 = vpop.f32.mrf.mxu0
  %v1011 = vadd.f32 0.0, %v1010
  %1012 = vmatmul.f32.gmra.mxu0 %v883
  %v1013 = vpop.f32.mrf.mxu0
  %v1014 = vadd.f32 0.0, %v1013
  %1015 = vmatmul.f32.gmra.mxu0 %v886
  %v1016 = vpop.f32.mrf.mxu0
  %v1017 = vadd.f32 0.0, %v1016
  %1018 = vmatmul.f32.gmra.mxu0 %v889
  %v1019 = vpop.f32.mrf.mxu0
  %v1020 = vadd.f32 0.0, %v1019
  %1021 = vmatmul.f32.gmra.mxu0 %v892
  %v1022 = vpop.f32.mrf.mxu0
  %v1023 = vadd.f32 0.0, %v1022
  %1024 = vmatmul.f32.gmra.mxu0 %v895
  %v1025 = vpop.f32.mrf.mxu0
  %v1026 = vadd.f32 0.0, %v1025
  %1027 = vmatmul.f32.gmra.mxu0 %v898
  %v1028 = vpop.f32.mrf.mxu0
  %v1029 = vadd.f32 0.0, %v1028
  %1030 = vmatmul.f32.gmra.mxu0 %v901
  %v1031 = vpop.f32.mrf.mxu0
  %v1032 = vadd.f32 0.0, %v1031
  %1033 = vmatmul.f32.gmra.mxu0 %v904
  %v1034 = vpop.f32.mrf.mxu0
  %v1035 = vadd.f32 0.0, %v1034
  %1036 = vmatmul.f32.gmra.mxu0 %v907
  %v1037 = vpop.f32.mrf.mxu0
  %v1038 = vadd.f32 0.0, %v1037
  %1039 = vmatmul.f32.gmra.mxu0 %v910
  %v1040 = vpop.f32.mrf.mxu0
  %v1041 = vadd.f32 0.0, %v1040
  %1042 = vmatmul.f32.gmra.mxu0 %v913
  %v1043 = vpop.f32.mrf.mxu0
  %v1044 = vadd.f32 0.0, %v1043
  %1045 = vmatmul.f32.gmra.mxu0 %v916
  %v1046 = vpop.f32.mrf.mxu0
  %v1047 = vadd.f32 0.0, %v1046
  %1048 = vmatmul.f32.gmra.mxu0 %v919
  %v1049 = vpop.f32.mrf.mxu0
  %v1050 = vadd.f32 0.0, %v1049
  %1051 = vmatmul.f32.gmra.mxu0 %v922
  %v1052 = vpop.f32.mrf.mxu0
  %v1053 = vadd.f32 0.0, %v1052
  %1054 = vmatmul.f32.gmra.mxu0 %v925
  %v1055 = vpop.f32.mrf.mxu0
  %v1056 = vadd.f32 0.0, %v1055
  %1057 = vdwg.mxu0
  %v1058 = vld [vmem:[#allocation2] sm:$0x1]
  %v1060 = vperm.slane %v1058, 0
  %v1062 = vadd.f32 %v945, %v1060
  %v1063 = vadd.f32 %v948, %v1060
  %v1064 = vadd.f32 %v951, %v1060
  %v1065 = vadd.f32 %v954, %v1060
  %v1066 = vadd.f32 %v957, %v1060
  %v1067 = vadd.f32 %v960, %v1060
  %v1068 = vadd.f32 %v963, %v1060
  %v1069 = vadd.f32 %v966, %v1060
  %v1070 = vadd.f32 %v969, %v1060
  %v1071 = vadd.f32 %v972, %v1060
  %v1072 = vadd.f32 %v975, %v1060
  %v1073 = vadd.f32 %v978, %v1060
  %v1074 = vadd.f32 %v981, %v1060
  %v1075 = vadd.f32 %v984, %v1060
  %v1076 = vadd.f32 %v987, %v1060
  %v1077 = vadd.f32 %v990, %v1060
  %v1078 = vadd.f32 %v993, %v1060
  %v1079 = vadd.f32 %v996, %v1060
  %v1080 = vadd.f32 %v999, %v1060
  %v1081 = vadd.f32 %v1002, %v1060
  %v1082 = vadd.f32 %v1005, %v1060
  %v1083 = vadd.f32 %v1008, %v1060
  %v1084 = vadd.f32 %v1011, %v1060
  %v1085 = vadd.f32 %v1014, %v1060
  %v1086 = vadd.f32 %v1017, %v1060
  %v1087 = vadd.f32 %v1020, %v1060
  %v1088 = vadd.f32 %v1023, %v1060
  %v1089 = vadd.f32 %v1026, %v1060
  %v1090 = vadd.f32 %v1029, %v1060
  %v1091 = vadd.f32 %v1032, %v1060
  %v1092 = vadd.f32 %v1035, %v1060
  %v1093 = vadd.f32 %v1038, %v1060
  %v1094 = vadd.f32 %v1041, %v1060
  %v1095 = vadd.f32 %v1044, %v1060
  %v1096 = vadd.f32 %v1047, %v1060
  %v1097 = vadd.f32 %v1050, %v1060
  %v1098 = vadd.f32 %v1053, %v1060
  %v1099 = vadd.f32 %v1056, %v1060
  %vm1100 = vcmask 7168
  %1101 = vst.msk [vmem:[%s8] sm:$0xff] %vm1100, %v1062
  %1102 = vst.msk [vmem:[%s8 + $0x8] sm:$0xff] %vm1100, %v1063
  %1103 = vst.msk [vmem:[%s8 + $0x10] sm:$0xff] %vm1100, %v1064
  %1104 = vst.msk [vmem:[%s8 + $0x18] sm:$0xff] %vm1100, %v1065
  %1105 = vst.msk [vmem:[%s8 + $0x20] sm:$0xff] %vm1100, %v1066
  %1106 = vst.msk [vmem:[%s8 + $0x28] sm:$0xff] %vm1100, %v1067
  %1107 = vst.msk [vmem:[%s8 + $0x30] sm:$0xff] %vm1100, %v1068
  %1108 = vst.msk [vmem:[%s8 + $0x38] sm:$0xff] %vm1100, %v1069
  %1109 = vst.msk [vmem:[%s8 + $0x40] sm:$0xff] %vm1100, %v1070
  %1110 = vst.msk [vmem:[%s8 + $0x48] sm:$0xff] %vm1100, %v1071
  %1111 = vst.msk [vmem:[%s8 + $0x50] sm:$0xff] %vm1100, %v1072
  %1112 = vst.msk [vmem:[%s8 + $0x58] sm:$0xff] %vm1100, %v1073
  %1113 = vst.msk [vmem:[%s8 + $0x60] sm:$0xff] %vm1100, %v1074
  %1114 = vst.msk [vmem:[%s8 + $0x68] sm:$0xff] %vm1100, %v1075
  %1115 = vst.msk [vmem:[%s8 + $0x70] sm:$0xff] %vm1100, %v1076
  %1116 = vst.msk [vmem:[%s8 + $0x78] sm:$0xff] %vm1100, %v1077
  %1117 = vst.msk [vmem:[%s8 + $0x80] sm:$0xff] %vm1100, %v1078
  %1118 = vst.msk [vmem:[%s8 + $0x88] sm:$0xff] %vm1100, %v1079
  %1119 = vst.msk [vmem:[%s8 + $0x90] sm:$0xff] %vm1100, %v1080
  %1120 = vst.msk [vmem:[%s8 + $0x98] sm:$0xff] %vm1100, %v1081
  %1121 = vst.msk [vmem:[%s8 + $0xa0] sm:$0xff] %vm1100, %v1082
  %1122 = vst.msk [vmem:[%s8 + $0xa8] sm:$0xff] %vm1100, %v1083
  %1123 = vst.msk [vmem:[%s8 + $0xb0] sm:$0xff] %vm1100, %v1084
  %1124 = vst.msk [vmem:[%s8 + $0xb8] sm:$0xff] %vm1100, %v1085
  %1125 = vst.msk [vmem:[%s8 + $0xc0] sm:$0xff] %vm1100, %v1086
  %1126 = vst.msk [vmem:[%s8 + $0xc8] sm:$0xff] %vm1100, %v1087
  %1127 = vst.msk [vmem:[%s8 + $0xd0] sm:$0xff] %vm1100, %v1088
  %1128 = vst.msk [vmem:[%s8 + $0xd8] sm:$0xff] %vm1100, %v1089
  %1129 = vst.msk [vmem:[%s8 + $0xe0] sm:$0xff] %vm1100, %v1090
  %1130 = vst.msk [vmem:[%s8 + $0xe8] sm:$0xff] %vm1100, %v1091
  %1131 = vst.msk [vmem:[%s8 + $0xf0] sm:$0xff] %vm1100, %v1092
  %1132 = vst.msk [vmem:[%s8 + $0xf8] sm:$0xff] %vm1100, %v1093
  %1133 = vst.msk [vmem:[%s8 + $0x100] sm:$0xff] %vm1100, %v1094
  %1134 = vst.msk [vmem:[%s8 + $0x108] sm:$0xff] %vm1100, %v1095
  %1135 = vst.msk [vmem:[%s8 + $0x110] sm:$0xff] %vm1100, %v1096
  %1136 = vst.msk [vmem:[%s8 + $0x118] sm:$0xff] %vm1100, %v1097
  %1137 = vst.msk [vmem:[%s8 + $0x120] sm:$0xff] %vm1100, %v1098
  %1138 = vst.msk [vmem:[%s8 + $0x128] sm:$0xff] %vm1100, %v1099
  // Predicated region
  $region34: #{tpu_custom_call.1} parent=0 // pred_check
    _
  $region35: #{tpu_custom_call.1} parent=0 // pred_check_branch
    %1140 = sbr.rel (0) target = $region37
  $region36: #{tpu_custom_call.1} parent=0 // pred_region
    _
  $region37: #{tpu_custom_call.1} parent=0 // pred_fallthru
    _
  // Predicated region
  $region38: #{tpu_custom_call.1} parent=0 // pred_check
    _
  $region39: #{tpu_custom_call.1} parent=0 // pred_check_branch
    %1142 = sbr.rel (0) target = $region41
  $region40: #{tpu_custom_call.1} parent=0 // pred_region
    _
  $region41: #{tpu_custom_call.1} parent=0 // pred_fallthru
    _

</llo_original>
